<compile_context>
chip_gen: v7x
topology: tpu7x:2x2x1
jax: 0.10.0
libtpu: 0.0.40
codegen_flags: <defaults>
</compile_context>

<pallas_src>
import math
import jax
import jax.numpy as jnp
from jax.experimental import pallas as pl
from jax.experimental.pallas import tpu as pltpu

LOAD_BALANCING_WEIGHT = 0.01   # args.load_balancing_weight default
MOE_LOSS_WEIGHT = 0.1          # args.moe_loss_weight default
EPS = 1e-8                     # matches torch eps in kl_div guard / cosine_similarity
_MXU_HEAD_MIN_H = 512          # switch the regression head onto the MXU above this H

# Lane layout of the packed raw-sum accumulator / stats output (per core-row):
#   lanes [0, E)    : per-expert usage sums ( sum_b gating[b, e] )
#   lanes 112..118  : sum(pred), sum(tgt), sum(pred^2), sum(tgt^2), sum(pred*tgt),
#                     sum((pred-tgt)^2), sum over pairs/batch of cosine similarity
_L_SP, _L_ST, _L_SPP, _L_STT, _L_SPT, _L_SSQ, _L_SDIV = range(112, 119)


def _moe_sts_kernel(logits_ref, w_ref, b_ref, target_ref, gating_ref, experts_ref,
                    pred_ref, stats_ref, acc_ref, uacc_ref):
    """One batch tile per inner grid step; raw partial sums; publish on the last step."""
    i = pl.program_id(1)
    inner = pl.num_programs(1)
    E = gating_ref.shape[1]

    # ---- init the per-core accumulators at the start of each core's slice ----
    @pl.when(i == 0)
    def _init():
        acc_ref[...] = jnp.zeros(acc_ref.shape, jnp.float32)
        uacc_ref[...] = jnp.zeros(uacc_ref.shape, jnp.float32)

    logits = logits_ref[...].astype(jnp.float32)      # (tb, H)
    bias = b_ref[...].astype(jnp.float32)             # (1, 1)
    tgt = target_ref[...].astype(jnp.float32)         # (tb, 1)
    gating = gating_ref[...].astype(jnp.float32)      # (tb, E)

    # ---- regression head: Linear(H, 1) ----
    if w_ref.shape[0] == 1:
        # small H: VPU multiply + lane reduce (cheaper than firing up the MXU)
        w = w_ref[...].astype(jnp.float32)             # (1, H)
        pred = jnp.sum(logits * w, axis=1, keepdims=True) + bias
    else:
        # large H: contraction on the otherwise-idle MXU (weight passed as (H, 1))
        w = w_ref[...].astype(jnp.float32)             # (H, 1)
        pred = jnp.dot(logits, w, preferred_element_type=jnp.float32) + bias
    pred_ref[...] = pred.astype(pred_ref.dtype)
    # TODO(synk): a lane-dense (1, block_b) pred store would avoid the masked 1-lane
    # stores (block_b/8 vst.msk per step), but needs a (tb,1)->(1,tb) in-kernel relayout;
    # pred/target are <1% of HBM traffic here and their HBM writeback is already
    # contiguous, so the proven column layout is kept.

    # ---- streaming raw moments (derived stats are finalized in the wrapper) ----
    diff = pred - tgt
    sp = jnp.sum(pred)
    st = jnp.sum(tgt)
    spp = jnp.sum(pred * pred)
    stt = jnp.sum(tgt * tgt)
    spt = jnp.sum(pred * tgt)
    ssq = jnp.sum(diff * diff)

    # ---- expert diversity: sum_{i<j} cos(n_i, n_j), summed over the tile ----
    # Identity: sum_{i<j} n_i.n_j = 0.5 * (|sum_i n_i|^2 - sum_i |n_i|^2)  per row, which
    # turns the O(E^2) pair loop into O(E) streaming work.  Expert blocks are sliced
    # straight off the ref (no (E, tb, D) monolith load -> bounded vreg pressure).
    if E >= 2:
        nsum = jnp.zeros(experts_ref.shape[1:], jnp.float32)   # (tb, D)
        qsum = jnp.zeros((), jnp.float32)
        for e in range(E):                                      # unrolled; E is small
            a = experts_ref[e].astype(jnp.float32)              # (tb, D)
            # TODO(synk): torch clamps the *product* of the two norms at 1e-8; we clamp
            # each squared norm at 1e-16 (differs only for near-zero expert vectors).
            inv = jax.lax.rsqrt(
                jnp.maximum(jnp.sum(a * a, axis=1, keepdims=True), EPS * EPS))
            n = a * inv
            nsum = nsum + n
            qsum = qsum + jnp.sum(n * n)
        sdiv = 0.5 * (jnp.sum(nsum * nsum) - qsum)
    else:
        sdiv = jnp.zeros((), jnp.float32)

    # ---- one packed accumulator update (instead of seven separate RMWs) ----
    lane = jax.lax.broadcasted_iota(jnp.int32, (1, 128), 1)
    upd = jnp.zeros((1, 128), jnp.float32)
    for lane_idx, val in ((_L_SP, sp), (_L_ST, st), (_L_SPP, spp), (_L_STT, stt),
                          (_L_SPT, spt), (_L_SSQ, ssq), (_L_SDIV, sdiv)):
        upd = jnp.where(lane == lane_idx, val, upd)
    acc_ref[...] += upd
    uacc_ref[...] += jnp.sum(gating, axis=0, keepdims=True)     # (1, E) usage sums

    # ---- last inner step: publish this core's raw partial sums ----
    @pl.when(i == inner - 1)
    def _finalize():
        stats_ref[...] = jnp.broadcast_to(acc_ref[...], stats_ref.shape)
        stats_ref[:, :E] = jnp.broadcast_to(uacc_ref[...], (stats_ref.shape[0], E))


def _vmem_budget_bytes():
    """Per-generation VMEM tile budget + scoped limit (v5e/v6e: 128 MiB, v7x: 64 MiB)."""
    cap = 64 * 1024 * 1024                       # conservative default (v7x per-TC)
    try:
        cap = int(getattr(pltpu.get_tpu_info(), "vmem_capacity_bytes", cap))
    except Exception:
        pass
    budget = max(12 * 1024 * 1024, min(64 * 1024 * 1024, cap // 2))
    limit = min(cap * 3 // 4, budget + 32 * 1024 * 1024)
    return budget, limit


def _per_row_bytes(H, E, D, b_logits, b_target, b_gating, b_experts):
    """Per-batch-row VMEM footprint: double-buffered inputs/output + f32 working set."""
    dma = 2 * (H * b_logits + b_target + E * b_gating + E * D * b_experts) + 2 * 4
    work = 4 * (H + 3 * D + E + 8)
    return dma + work


def _plan_tiles(B, per_row, budget, align):
    """Pick (block_b, padded_B, num_core_slices) under the VMEM budget."""
    max_rows = int(max(budget, per_row) // per_row)
    max_rows = max(align, (max_rows // align) * align)
    max_rows = min(max_rows, 2048)               # per-step overhead is ~0.35us; enough
    if B <= max_rows:
        return B, B, 1                           # single tile (block == full batch)
    best = 0
    for c in range(align, max_rows + 1, align):  # prefer an exact divisor (no padding)
        if B % c == 0:
            best = c
    if best >= align:
        block_b, Bp = best, B
    else:                                        # no divisor: zero-pad the batch
        block_b = max_rows
        Bp = -(-B // block_b) * block_b
    steps = Bp // block_b
    nc = 2 if (steps % 2 == 0 and steps >= 2) else 1
    return block_b, Bp, nc


def moe_sts_loss_pallas(logits, head_w, head_b, target, gating, expert_outputs,
                        block_b=None):
    """Returns (pred, sts, lb, div, total, pearson, entropy, most_used, usage_var,
                pred_mean, target_mean, usage)."""
    logits = jnp.asarray(logits)                 # native dtype (bf16 passes through)
    gating = jnp.asarray(gating)
    expert_outputs = jnp.asarray(expert_outputs)
    head_w = jnp.asarray(head_w)
    head_b = jnp.asarray(head_b)
    target = jnp.asarray(target)

    B, H = logits.shape
    E = gating.shape[1]
    D = expert_outputs.shape[2]
    assert expert_outputs.shape[0] == E and expert_outputs.shape[1] == B
    assert E <= _L_SP, "per-expert usage lanes would collide with the scalar stat lanes"

    # Head params: orientation picks the head path statically inside the kernel.
    w2d = head_w.reshape(1, H) if H < _MXU_HEAD_MIN_H else head_w.reshape(H, 1)
    b2d = head_b.reshape(1, 1)
    tgt2d = target.reshape(B, 1)

    # ---- tiling plan: generation-aware VMEM budget, padding only if unavoidable ----
    itemsizes = [jnp.dtype(a.dtype).itemsize
                 for a in (logits, tgt2d, gating, expert_outputs)]
    align = 8 * max(1, 4 // min(itemsizes))      # 8 rows for f32, 16 for bf16, 32 for i8
    per_row = _per_row_bytes(H, E, D, *itemsizes)
    budget, vmem_limit = _vmem_budget_bytes()
    eff_budget = max(budget - 2 * 1024 * 1024, 4 * 1024 * 1024)

    if block_b is None:
        block_b, Bp, nc = _plan_tiles(B, per_row, eff_budget, align)
    else:
        block_b = int(block_b)
        if block_b >= B:
            block_b, Bp, nc = B, B, 1
        else:
            block_b = max(align, (block_b // align) * align)
            Bp = -(-B // block_b) * block_b
            steps = Bp // block_b
            nc = 2 if (steps % 2 == 0 and steps >= 2) else 1
    steps = Bp // block_b
    inner = steps // nc
    pad = Bp - B

    if pad:
        # Zero padding: padded rows contribute pred == bias, target == 0, gating == 0,
        # experts == 0 (normalized to 0) -- corrected analytically below.
        logits = jnp.pad(logits, ((0, pad), (0, 0)))
        tgt2d = jnp.pad(tgt2d, ((0, pad), (0, 0)))
        gating = jnp.pad(gating, ((0, pad), (0, 0)))
        expert_outputs = jnp.pad(expert_outputs, ((0, 0), (0, pad), (0, 0)))

    grid_spec = pltpu.PrefetchScalarGridSpec(
        num_scalar_prefetch=0,
        grid=(nc, inner),
        in_specs=[
            pl.BlockSpec((block_b, H), lambda c, i: (c * inner + i, 0)),        # logits
            pl.BlockSpec(w2d.shape, lambda c, i: (0, 0)),                       # head W
            pl.BlockSpec((1, 1), lambda c, i: (0, 0)),                          # head b
            pl.BlockSpec((block_b, 1), lambda c, i: (c * inner + i, 0)),        # targets
            pl.BlockSpec((block_b, E), lambda c, i: (c * inner + i, 0)),        # gating
            pl.BlockSpec((E, block_b, D), lambda c, i: (0, c * inner + i, 0)),  # experts
        ],
        out_specs=[
            pl.BlockSpec((block_b, 1), lambda c, i: (c * inner + i, 0)),        # pred
            pl.BlockSpec((8, 128), lambda c, i: (c, 0)),                        # raw sums
        ],
        scratch_shapes=[pltpu.VMEM((1, 128), jnp.float32),   # packed scalar moments
                        pltpu.VMEM((1, E), jnp.float32)],    # per-expert usage sums
    )

    pred_pad, stats_raw = pl.pallas_call(
        _moe_sts_kernel,
        out_shape=(jax.ShapeDtypeStruct((Bp, 1), jnp.float32),
                   jax.ShapeDtypeStruct((nc * 8, 128), jnp.float32)),
        grid_spec=grid_spec,
        compiler_params=pltpu.CompilerParams(
            dimension_semantics=("parallel", "arbitrary"),   # core split / accumulation
            vmem_limit_bytes=int(vmem_limit)),
    )(logits, w2d, b2d, tgt2d, gating, expert_outputs)

    # ---- combine per-core raw sums and derive the statistics (O(E) scalar math) ----
    raw = stats_raw.reshape(nc, 8, 128)[:, 0, :].sum(axis=0)            # (128,)
    usage_sum = raw[:E]
    sp, st_, spp = raw[_L_SP], raw[_L_ST], raw[_L_SPP]
    stt, spt, ssq, sdiv = raw[_L_STT], raw[_L_SPT], raw[_L_SSQ], raw[_L_SDIV]
    if pad:
        bias0 = b2d.astype(jnp.float32)[0, 0]
        sp = sp - pad * bias0
        spp = spp - pad * bias0 * bias0
        ssq = ssq - pad * bias0 * bias0

    Bf = float(B)
    usage = usage_sum / Bf
    sts = ssq / Bf
    uniform = 1.0 / float(E)
    kl = jnp.sum(uniform * (math.log(uniform) - jnp.log(usage + EPS))) / float(E)
    num_pairs = max(E * (E - 1) // 2, 1)
    div = sdiv / (Bf * float(num_pairs))
    total = sts + LOAD_BALANCING_WEIGHT * kl + MOE_LOSS_WEIGHT * div

    pred_mean = sp / Bf
    target_mean = st_ / Bf
    # TODO(synk): Pearson from uncentered f32 moments can cancel catastrophically when
    # |mean| >> std at very large B; a centered estimate needs a second data pass.
    num = spt - sp * st_ / Bf
    varp = jnp.maximum(spp - sp * sp / Bf, 0.0)
    vart = jnp.maximum(stt - st_ * st_ / Bf, 0.0)
    den = jnp.sqrt(varp * vart)
    pear = jnp.where(den == 0.0, 0.0, num / jnp.where(den == 0.0, 1.0, den))

    ent = -jnp.sum(usage * jnp.log(usage + EPS))
    most = jnp.argmax(usage).astype(jnp.float32)
    u_var = jnp.var(usage, ddof=1) if E > 1 else jnp.zeros((), jnp.float32)

    pred = pred_pad[:B]
    return (pred, sts, kl, div, total, pear, ent, most, u_var,
            pred_mean, target_mean, usage)


def _reference(logits, w, b, target, gating, experts):
    """Pure-JAX reference mirroring the PyTorch semantics (w given as (1, H))."""
    pred = jnp.sum(logits * w, axis=1, keepdims=True) + b
    sts = jnp.mean((pred - target) ** 2)
    usage = gating.mean(0)
    E = usage.shape[0]
    uni = jnp.ones_like(usage) / E
    kl = jnp.sum(uni * (jnp.log(uni) - jnp.log(usage + EPS))) / E
    sims = []
    for i in range(experts.shape[0]):
        for j in range(i + 1, experts.shape[0]):
            a, c = experts[i], experts[j]
            cos = jnp.sum(a * c, axis=1) / jnp.maximum(
                jnp.linalg.norm(a, axis=1) * jnp.linalg.norm(c, axis=1), EPS)
            sims.append(cos.mean())
    div = jnp.mean(jnp.stack(sims))
    total = sts + LOAD_BALANCING_WEIGHT * kl + MOE_LOSS_WEIGHT * div
    pm, tm = pred.mean(), target.mean()
    num = jnp.sum((pred - pm) * (target - tm))
    den = jnp.sqrt(jnp.sum((pred - pm) ** 2) * jnp.sum((target - tm) ** 2))
    pear = jnp.where(den == 0, 0.0, num / jnp.where(den == 0, 1.0, den))
    ent = -jnp.sum(usage * jnp.log(usage + EPS))
    most = jnp.argmax(usage).astype(jnp.float32)
    var = jnp.var(usage, ddof=1)
    return pred, sts, kl, div, total, pear, ent, most, var, pm, tm, usage


def record_logging_output(logging_output, batch_denom, content):
    """Non-distributed glue mirroring MoE_STSLoss.record_logging_output."""
    # TODO(synk): torch.distributed all_reduce path has no in-kernel equivalent (host-side).
    keep_as_is = {'pearson', 'spearman', 'expert_entropy', 'most_used_expert',
                  'usage_variance', 'predictions', 'target'}
    for k, v in content.items():
        if k in keep_as_is or (k.startswith('expert_') and k.endswith('_usage')):
            rec = float(v)
        else:
            rec = float(v) / batch_denom
        logging_output.setdefault(k, []).append(rec)
    return logging_output


if __name__ == "__main__":
    # ---- run 1: f32 inputs, small H (VPU head), forced multi-tile so the dual-core
    #      grid axis (nc=2) + streaming accumulators + wrapper combine are exercised ----
    B, H, E, D = 16, 128, 4, 128      # batch, hidden, num_experts, expert output dim
    key = jax.random.PRNGKey(0)
    k1, k2, k3, k4, k5 = jax.random.split(key, 5)

    logits = jax.random.normal(k1, (B, H), dtype=jnp.float32)
    gating = jax.nn.softmax(jax.random.normal(k2, (B, E), dtype=jnp.float32), axis=-1)
    expert_outputs = jax.random.normal(k3, (E, B, D), dtype=jnp.float32)
    target = jax.random.uniform(k4, (B, 1), dtype=jnp.float32, minval=0.0, maxval=5.0)
    head_w = 0.02 * jax.random.normal(k5, (1, H), dtype=jnp.float32)  # torch init
    head_b = jnp.zeros((1, 1), dtype=jnp.float32)

    outs = moe_sts_loss_pallas(logits, head_w, head_b, target, gating, expert_outputs,
                               block_b=8)
    outs = jax.block_until_ready(outs)
    ref = _reference(logits, head_w, head_b, target, gating, expert_outputs)
    for g, r in zip(outs, ref):
        assert jnp.allclose(g, r, atol=1e-5, rtol=1e-5), (g, r)

    (pred, sts, lb, div, total, pear, ent, most, var, pmean, tmean, usage) = outs
    content = {
        'loss': sts, 'total_loss': total,
        'pearson': pear, 'spearman': pear,
        'predictions': pmean, 'target': tmean,
        'moe_load_balancing': lb, 'moe_diversity': div,
        'expert_entropy': ent, 'most_used_expert': most,
        'usage_variance': var,
    }
    for i in range(E):
        content[f'expert_{i}_usage'] = usage[i]
    logging_output = record_logging_output({}, float(B), content)
    total_loss = total
    _ = (total_loss, logging_output)

    # ---- run 2: bf16 activations pass through natively (no wrapper f32 cast),
    #      planner-chosen tile, single grid step ----
    H2 = 256
    j1, j2, j3, j4, j5 = jax.random.split(jax.random.PRNGKey(1), 5)
    logits2 = jax.random.normal(j1, (B, H2), dtype=jnp.float32).astype(jnp.bfloat16)
    gating2 = jax.nn.softmax(jax.random.normal(j2, (B, E), dtype=jnp.float32),
                             axis=-1).astype(jnp.bfloat16)
    experts2 = jax.random.normal(j3, (E, B, D), dtype=jnp.float32).astype(jnp.bfloat16)
    target2 = jax.random.uniform(j4, (B, 1), dtype=jnp.float32, minval=0.0, maxval=5.0)
    head_w2 = 0.02 * jax.random.normal(j5, (1, H2), dtype=jnp.float32)
    head_b2 = jnp.zeros((1, 1), dtype=jnp.float32)

    outs2 = moe_sts_loss_pallas(logits2, head_w2, head_b2, target2, gating2, experts2)
    outs2 = jax.block_until_ready(outs2)
    ref2 = _reference(logits2.astype(jnp.float32), head_w2, head_b2, target2,
                      gating2.astype(jnp.float32), experts2.astype(jnp.float32))
    for g, r in zip(outs2, ref2):
        assert jnp.allclose(g, r, atol=1e-4, rtol=1e-4), (g, r)

    print("KERNEL_OK")
</pallas_src>

<mosaic_0001>
module attributes {stable_mosaic.version = 11 : i64} {
  func.func @_moe_sts_kernel(%arg0: i32, %arg1: i32, %arg2: memref<8x128xf32, #tpu.memory_space<vmem>>, %arg3: memref<1x128xf32, #tpu.memory_space<vmem>>, %arg4: memref<1x1xf32, #tpu.memory_space<vmem>>, %arg5: memref<8x1xf32, #tpu.memory_space<vmem>>, %arg6: memref<8x4xf32, #tpu.memory_space<vmem>>, %arg7: memref<4x8x128xf32, #tpu.memory_space<vmem>>, %arg8: memref<8x1xf32, #tpu.memory_space<vmem>>, %arg9: memref<8x128xf32, #tpu.memory_space<vmem>>, %arg10: memref<1x128xf32, #tpu.memory_space<vmem>>, %arg11: memref<1x4xf32, #tpu.memory_space<vmem>>) attributes {dimension_semantics = [#tpu.dimension_semantics<parallel>, #tpu.dimension_semantics<arbitrary>], iteration_bounds = array<i64: 2, 1>, scalar_prefetch = 0 : i64, scratch_operands = 2 : i64, tpu.core_type = #tpu.core_type<tc>, window_params = [{transform_indices = @transform_0, window_bounds = array<i64: 8, 128>}, {pipeline_mode = #tpu.pipeline_mode<synchronous>, transform_indices = @transform_1, window_bounds = array<i64: 1, 128>}, {pipeline_mode = #tpu.pipeline_mode<synchronous>, transform_indices = @transform_2, window_bounds = array<i64: 1, 1>}, {transform_indices = @transform_3, window_bounds = array<i64: 8, 1>}, {transform_indices = @transform_4, window_bounds = array<i64: 8, 4>}, {transform_indices = @transform_5, window_bounds = array<i64: 4, 8, 128>}, {transform_indices = @transform_6, window_bounds = array<i64: 8, 1>}, {transform_indices = @transform_7, window_bounds = array<i64: 8, 128>}]} {
    %c0_i32 = arith.constant 0 : i32
    %0 = arith.cmpi eq, %arg1, %c0_i32 : i32
    %1 = arith.extui %0 : i1 to i32
    %c0_i32_0 = arith.constant 0 : i32
    %2 = arith.cmpi ne, %1, %c0_i32_0 : i32
    scf.if %2 {
      %cst_55 = arith.constant 0.000000e+00 : f32
      %161 = vector.broadcast %cst_55 : f32 to vector<1x128xf32>
      %c0_56 = arith.constant 0 : index
      %c0_57 = arith.constant 0 : index
      %162 = vector.load %arg10[%c0_56, %c0_57] : memref<1x128xf32, #tpu.memory_space<vmem>>, vector<1x128xf32>
      tpu.vector_store %arg10[%c0_56, %c0_57], %161 {strides = array<i32>} : memref<1x128xf32, #tpu.memory_space<vmem>>, vector<1x128xf32>,
      %cst_58 = arith.constant 0.000000e+00 : f32
      %163 = vector.broadcast %cst_58 : f32 to vector<1x4xf32>
      %c0_59 = arith.constant 0 : index
      %c0_60 = arith.constant 0 : index
      %164 = vector.load %arg11[%c0_59, %c0_60] : memref<1x4xf32, #tpu.memory_space<vmem>>, vector<1x4xf32>
      tpu.vector_store %arg11[%c0_59, %c0_60], %163 {strides = array<i32>} : memref<1x4xf32, #tpu.memory_space<vmem>>, vector<1x4xf32>,
    } else {
    }
    %c0 = arith.constant 0 : index
    %c0_1 = arith.constant 0 : index
    %3 = vector.load %arg2[%c0, %c0_1] : memref<8x128xf32, #tpu.memory_space<vmem>>, vector<8x128xf32>
    %c0_2 = arith.constant 0 : index
    %c0_3 = arith.constant 0 : index
    %4 = vector.load %arg4[%c0_2, %c0_3] : memref<1x1xf32, #tpu.memory_space<vmem>>, vector<1x1xf32>
    %c0_4 = arith.constant 0 : index
    %c0_5 = arith.constant 0 : index
    %5 = vector.load %arg5[%c0_4, %c0_5] : memref<8x1xf32, #tpu.memory_space<vmem>>, vector<8x1xf32>
    %c0_6 = arith.constant 0 : index
    %c0_7 = arith.constant 0 : index
    %6 = vector.load %arg6[%c0_6, %c0_7] : memref<8x4xf32, #tpu.memory_space<vmem>>, vector<8x4xf32>
    %c0_8 = arith.constant 0 : index
    %c0_9 = arith.constant 0 : index
    %7 = vector.load %arg3[%c0_8, %c0_9] : memref<1x128xf32, #tpu.memory_space<vmem>>, vector<1x128xf32>
    %8 = vector.broadcast %7 : vector<1x128xf32> to vector<8x128xf32>
    %9 = arith.mulf %3, %8 : vector<8x128xf32>
    %cst = arith.constant dense<0.000000e+00> : vector<8xf32>
    %10 = vector.multi_reduction <add>, %9, %cst [1] : vector<8x128xf32> to vector<8xf32>
    %11 = vector.shape_cast %10 : vector<8xf32> to vector<8x1xf32>
    %12 = vector.broadcast %4 : vector<1x1xf32> to vector<8x1xf32>
    %13 = arith.addf %11, %12 : vector<8x1xf32>
    %c0_10 = arith.constant 0 : index
    %c0_11 = arith.constant 0 : index
    %14 = vector.load %arg8[%c0_10, %c0_11] : memref<8x1xf32, #tpu.memory_space<vmem>>, vector<8x1xf32>
    tpu.vector_store %arg8[%c0_10, %c0_11], %13 {strides = array<i32>} : memref<8x1xf32, #tpu.memory_space<vmem>>, vector<8x1xf32>,
    %15 = arith.subf %13, %5 : vector<8x1xf32>
    %16 = vector.shape_cast %13 : vector<8x1xf32> to vector<1x8x1xf32>
    %cst_12 = arith.constant dense<0.000000e+00> : vector<1xf32>
    %17 = vector.multi_reduction <add>, %16, %cst_12 [1, 2] : vector<1x8x1xf32> to vector<1xf32>
    %18 = vector.shape_cast %17 : vector<1xf32> to vector<1x1x1xf32>
    %19 = vector.extract %18[0, 0, 0] : f32 from vector<1x1x1xf32>
    %20 = vector.shape_cast %5 : vector<8x1xf32> to vector<1x8x1xf32>
    %cst_13 = arith.constant dense<0.000000e+00> : vector<1xf32>
    %21 = vector.multi_reduction <add>, %20, %cst_13 [1, 2] : vector<1x8x1xf32> to vector<1xf32>
    %22 = vector.shape_cast %21 : vector<1xf32> to vector<1x1x1xf32>
    %23 = vector.extract %22[0, 0, 0] : f32 from vector<1x1x1xf32>
    %24 = arith.mulf %13, %13 : vector<8x1xf32>
    %25 = vector.shape_cast %24 : vector<8x1xf32> to vector<1x8x1xf32>
    %cst_14 = arith.constant dense<0.000000e+00> : vector<1xf32>
    %26 = vector.multi_reduction <add>, %25, %cst_14 [1, 2] : vector<1x8x1xf32> to vector<1xf32>
    %27 = vector.shape_cast %26 : vector<1xf32> to vector<1x1x1xf32>
    %28 = vector.extract %27[0, 0, 0] : f32 from vector<1x1x1xf32>
    %29 = arith.mulf %5, %5 : vector<8x1xf32>
    %30 = vector.shape_cast %29 : vector<8x1xf32> to vector<1x8x1xf32>
    %cst_15 = arith.constant dense<0.000000e+00> : vector<1xf32>
    %31 = vector.multi_reduction <add>, %30, %cst_15 [1, 2] : vector<1x8x1xf32> to vector<1xf32>
    %32 = vector.shape_cast %31 : vector<1xf32> to vector<1x1x1xf32>
    %33 = vector.extract %32[0, 0, 0] : f32 from vector<1x1x1xf32>
    %34 = arith.mulf %13, %5 : vector<8x1xf32>
    %35 = vector.shape_cast %34 : vector<8x1xf32> to vector<1x8x1xf32>
    %cst_16 = arith.constant dense<0.000000e+00> : vector<1xf32>
    %36 = vector.multi_reduction <add>, %35, %cst_16 [1, 2] : vector<1x8x1xf32> to vector<1xf32>
    %37 = vector.shape_cast %36 : vector<1xf32> to vector<1x1x1xf32>
    %38 = vector.extract %37[0, 0, 0] : f32 from vector<1x1x1xf32>
    %39 = arith.mulf %15, %15 : vector<8x1xf32>
    %40 = vector.shape_cast %39 : vector<8x1xf32> to vector<1x8x1xf32>
    %cst_17 = arith.constant dense<0.000000e+00> : vector<1xf32>
    %41 = vector.multi_reduction <add>, %40, %cst_17 [1, 2] : vector<1x8x1xf32> to vector<1xf32>
    %42 = vector.shape_cast %41 : vector<1xf32> to vector<1x1x1xf32>
    %43 = vector.extract %42[0, 0, 0] : f32 from vector<1x1x1xf32>
    %cst_18 = arith.constant 0.000000e+00 : f32
    %44 = vector.broadcast %cst_18 : f32 to vector<8x128xf32>
    %c0_19 = arith.constant 0 : index
    %c0_20 = arith.constant 0 : index
    %c0_21 = arith.constant 0 : index
    %45 = vector.load %arg7[%c0_19, %c0_20, %c0_21] : memref<4x8x128xf32, #tpu.memory_space<vmem>>, vector<1x8x128xf32>
    %46 = vector.shape_cast %45 : vector<1x8x128xf32> to vector<8x128xf32>
    %47 = arith.mulf %46, %46 : vector<8x128xf32>
    %cst_22 = arith.constant dense<0.000000e+00> : vector<8xf32>
    %48 = vector.multi_reduction <add>, %47, %cst_22 [1] : vector<8x128xf32> to vector<8xf32>
    %49 = vector.shape_cast %48 : vector<8xf32> to vector<8x1xf32>
    %cst_23 = arith.constant 1.000000e-16 : f32
    %50 = vector.broadcast %cst_23 : f32 to vector<8x1xf32>
    %51 = arith.maximumf %49, %50 : vector<8x1xf32>
    %52 = math.rsqrt %51 : vector<8x1xf32>
    %53 = vector.broadcast %52 : vector<8x1xf32> to vector<8x128xf32>
    %54 = arith.mulf %46, %53 : vector<8x128xf32>
    %55 = arith.addf %44, %54 : vector<8x128xf32>
    %56 = arith.mulf %54, %54 : vector<8x128xf32>
    %57 = vector.shape_cast %56 : vector<8x128xf32> to vector<1x8x128xf32>
    %cst_24 = arith.constant dense<0.000000e+00> : vector<1xf32>
    %58 = vector.multi_reduction <add>, %57, %cst_24 [1, 2] : vector<1x8x128xf32> to vector<1xf32>
    %59 = vector.shape_cast %58 : vector<1xf32> to vector<1x1x1xf32>
    %60 = vector.extract %59[0, 0, 0] : f32 from vector<1x1x1xf32>
    %cst_25 = arith.constant 0.000000e+00 : f32
    %61 = arith.addf %cst_25, %60 : f32
    %c1 = arith.constant 1 : index
    %c0_26 = arith.constant 0 : index
    %c0_27 = arith.constant 0 : index
    %62 = vector.load %arg7[%c1, %c0_26, %c0_27] : memref<4x8x128xf32, #tpu.memory_space<vmem>>, vector<1x8x128xf32>
    %63 = vector.shape_cast %62 : vector<1x8x128xf32> to vector<8x128xf32>
    %64 = arith.mulf %63, %63 : vector<8x128xf32>
    %cst_28 = arith.constant dense<0.000000e+00> : vector<8xf32>
    %65 = vector.multi_reduction <add>, %64, %cst_28 [1] : vector<8x128xf32> to vector<8xf32>
    %66 = vector.shape_cast %65 : vector<8xf32> to vector<8x1xf32>
    %cst_29 = arith.constant 1.000000e-16 : f32
    %67 = vector.broadcast %cst_29 : f32 to vector<8x1xf32>
    %68 = arith.maximumf %66, %67 : vector<8x1xf32>
    %69 = math.rsqrt %68 : vector<8x1xf32>
    %70 = vector.broadcast %69 : vector<8x1xf32> to vector<8x128xf32>
    %71 = arith.mulf %63, %70 : vector<8x128xf32>
    %72 = arith.addf %55, %71 : vector<8x128xf32>
    %73 = arith.mulf %71, %71 : vector<8x128xf32>
    %74 = vector.shape_cast %73 : vector<8x128xf32> to vector<1x8x128xf32>
    %cst_30 = arith.constant dense<0.000000e+00> : vector<1xf32>
    %75 = vector.multi_reduction <add>, %74, %cst_30 [1, 2] : vector<1x8x128xf32> to vector<1xf32>
    %76 = vector.shape_cast %75 : vector<1xf32> to vector<1x1x1xf32>
    %77 = vector.extract %76[0, 0, 0] : f32 from vector<1x1x1xf32>
    %78 = arith.addf %61, %77 : f32
    %c2 = arith.constant 2 : index
    %c0_31 = arith.constant 0 : index
    %c0_32 = arith.constant 0 : index
    %79 = vector.load %arg7[%c2, %c0_31, %c0_32] : memref<4x8x128xf32, #tpu.memory_space<vmem>>, vector<1x8x128xf32>
    %80 = vector.shape_cast %79 : vector<1x8x128xf32> to vector<8x128xf32>
    %81 = arith.mulf %80, %80 : vector<8x128xf32>
    %cst_33 = arith.constant dense<0.000000e+00> : vector<8xf32>
    %82 = vector.multi_reduction <add>, %81, %cst_33 [1] : vector<8x128xf32> to vector<8xf32>
    %83 = vector.shape_cast %82 : vector<8xf32> to vector<8x1xf32>
    %cst_34 = arith.constant 1.000000e-16 : f32
    %84 = vector.broadcast %cst_34 : f32 to vector<8x1xf32>
    %85 = arith.maximumf %83, %84 : vector<8x1xf32>
    %86 = math.rsqrt %85 : vector<8x1xf32>
    %87 = vector.broadcast %86 : vector<8x1xf32> to vector<8x128xf32>
    %88 = arith.mulf %80, %87 : vector<8x128xf32>
    %89 = arith.addf %72, %88 : vector<8x128xf32>
    %90 = arith.mulf %88, %88 : vector<8x128xf32>
    %91 = vector.shape_cast %90 : vector<8x128xf32> to vector<1x8x128xf32>
    %cst_35 = arith.constant dense<0.000000e+00> : vector<1xf32>
    %92 = vector.multi_reduction <add>, %91, %cst_35 [1, 2] : vector<1x8x128xf32> to vector<1xf32>
    %93 = vector.shape_cast %92 : vector<1xf32> to vector<1x1x1xf32>
    %94 = vector.extract %93[0, 0, 0] : f32 from vector<1x1x1xf32>
    %95 = arith.addf %78, %94 : f32
    %c3 = arith.constant 3 : index
    %c0_36 = arith.constant 0 : index
    %c0_37 = arith.constant 0 : index
    %96 = vector.load %arg7[%c3, %c0_36, %c0_37] : memref<4x8x128xf32, #tpu.memory_space<vmem>>, vector<1x8x128xf32>
    %97 = vector.shape_cast %96 : vector<1x8x128xf32> to vector<8x128xf32>
    %98 = arith.mulf %97, %97 : vector<8x128xf32>
    %cst_38 = arith.constant dense<0.000000e+00> : vector<8xf32>
    %99 = vector.multi_reduction <add>, %98, %cst_38 [1] : vector<8x128xf32> to vector<8xf32>
    %100 = vector.shape_cast %99 : vector<8xf32> to vector<8x1xf32>
    %cst_39 = arith.constant 1.000000e-16 : f32
    %101 = vector.broadcast %cst_39 : f32 to vector<8x1xf32>
    %102 = arith.maximumf %100, %101 : vector<8x1xf32>
    %103 = math.rsqrt %102 : vector<8x1xf32>
    %104 = vector.broadcast %103 : vector<8x1xf32> to vector<8x128xf32>
    %105 = arith.mulf %97, %104 : vector<8x128xf32>
    %106 = arith.addf %89, %105 : vector<8x128xf32>
    %107 = arith.mulf %105, %105 : vector<8x128xf32>
    %108 = vector.shape_cast %107 : vector<8x128xf32> to vector<1x8x128xf32>
    %cst_40 = arith.constant dense<0.000000e+00> : vector<1xf32>
    %109 = vector.multi_reduction <add>, %108, %cst_40 [1, 2] : vector<1x8x128xf32> to vector<1xf32>
    %110 = vector.shape_cast %109 : vector<1xf32> to vector<1x1x1xf32>
    %111 = vector.extract %110[0, 0, 0] : f32 from vector<1x1x1xf32>
    %112 = arith.addf %95, %111 : f32
    %113 = arith.mulf %106, %106 : vector<8x128xf32>
    %114 = vector.shape_cast %113 : vector<8x128xf32> to vector<1x8x128xf32>
    %cst_41 = arith.constant dense<0.000000e+00> : vector<1xf32>
    %115 = vector.multi_reduction <add>, %114, %cst_41 [1, 2] : vector<1x8x128xf32> to vector<1xf32>
    %116 = vector.shape_cast %115 : vector<1xf32> to vector<1x1x1xf32>
    %117 = vector.extract %116[0, 0, 0] : f32 from vector<1x1x1xf32>
    %118 = arith.subf %117, %112 : f32
    %cst_42 = arith.constant 5.000000e-01 : f32
    %119 = arith.mulf %cst_42, %118 : f32
    %120 = tpu.iota {dimensions = array<i32: 1>} : vector<1x128xi32>
    %cst_43 = arith.constant 0.000000e+00 : f32
    %121 = vector.broadcast %cst_43 : f32 to vector<1x128xf32>
    %c112_i32 = arith.constant 112 : i32
    %122 = vector.broadcast %c112_i32 : i32 to vector<1x128xi32>
    %123 = arith.cmpi eq, %120, %122 : vector<1x128xi32>
    %124 = vector.broadcast %19 : f32 to vector<1x128xf32>
    %125 = arith.select %123, %124, %121 : vector<1x128xi1>, vector<1x128xf32>
    %c113_i32 = arith.constant 113 : i32
    %126 = vector.broadcast %c113_i32 : i32 to vector<1x128xi32>
    %127 = arith.cmpi eq, %120, %126 : vector<1x128xi32>
    %128 = vector.broadcast %23 : f32 to vector<1x128xf32>
    %129 = arith.select %127, %128, %125 : vector<1x128xi1>, vector<1x128xf32>
    %c114_i32 = arith.constant 114 : i32
    %130 = vector.broadcast %c114_i32 : i32 to vector<1x128xi32>
    %131 = arith.cmpi eq, %120, %130 : vector<1x128xi32>
    %132 = vector.broadcast %28 : f32 to vector<1x128xf32>
    %133 = arith.select %131, %132, %129 : vector<1x128xi1>, vector<1x128xf32>
    %c115_i32 = arith.constant 115 : i32
    %134 = vector.broadcast %c115_i32 : i32 to vector<1x128xi32>
    %135 = arith.cmpi eq, %120, %134 : vector<1x128xi32>
    %136 = vector.broadcast %33 : f32 to vector<1x128xf32>
    %137 = arith.select %135, %136, %133 : vector<1x128xi1>, vector<1x128xf32>
    %c116_i32 = arith.constant 116 : i32
    %138 = vector.broadcast %c116_i32 : i32 to vector<1x128xi32>
    %139 = arith.cmpi eq, %120, %138 : vector<1x128xi32>
    %140 = vector.broadcast %38 : f32 to vector<1x128xf32>
    %141 = arith.select %139, %140, %137 : vector<1x128xi1>, vector<1x128xf32>
    %c117_i32 = arith.constant 117 : i32
    %142 = vector.broadcast %c117_i32 : i32 to vector<1x128xi32>
    %143 = arith.cmpi eq, %120, %142 : vector<1x128xi32>
    %144 = vector.broadcast %43 : f32 to vector<1x128xf32>
    %145 = arith.select %143, %144, %141 : vector<1x128xi1>, vector<1x128xf32>
    %c118_i32 = arith.constant 118 : i32
    %146 = vector.broadcast %c118_i32 : i32 to vector<1x128xi32>
    %147 = arith.cmpi eq, %120, %146 : vector<1x128xi32>
    %148 = vector.broadcast %119 : f32 to vector<1x128xf32>
    %149 = arith.select %147, %148, %145 : vector<1x128xi1>, vector<1x128xf32>
    %c0_44 = arith.constant 0 : index
    %c0_45 = arith.constant 0 : index
    %150 = vector.load %arg10[%c0_44, %c0_45] : memref<1x128xf32, #tpu.memory_space<vmem>>, vector<1x128xf32>
    %151 = arith.addf %150, %149 : vector<1x128xf32>
    %c0_46 = arith.constant 0 : index
    %c0_47 = arith.constant 0 : index
    %152 = vector.load %arg10[%c0_46, %c0_47] : memref<1x128xf32, #tpu.memory_space<vmem>>, vector<1x128xf32>
    tpu.vector_store %arg10[%c0_46, %c0_47], %151 {strides = array<i32>} : memref<1x128xf32, #tpu.memory_space<vmem>>, vector<1x128xf32>,
    %c0_48 = arith.constant 0 : index
    %c0_49 = arith.constant 0 : index
    %153 = vector.load %arg11[%c0_48, %c0_49] : memref<1x4xf32, #tpu.memory_space<vmem>>, vector<1x4xf32>
    %cst_50 = arith.constant dense<0.000000e+00> : vector<4xf32>
    %154 = vector.multi_reduction <add>, %6, %cst_50 [0] : vector<8x4xf32> to vector<4xf32>
    %155 = vector.shape_cast %154 : vector<4xf32> to vector<1x4xf32>
    %156 = arith.addf %153, %155 : vector<1x4xf32>
    %c0_51 = arith.constant 0 : index
    %c0_52 = arith.constant 0 : index
    %157 = vector.load %arg11[%c0_51, %c0_52] : memref<1x4xf32, #tpu.memory_space<vmem>>, vector<1x4xf32>
    tpu.vector_store %arg11[%c0_51, %c0_52], %156 {strides = array<i32>} : memref<1x4xf32, #tpu.memory_space<vmem>>, vector<1x4xf32>,
    %c0_i32_53 = arith.constant 0 : i32
    %158 = arith.cmpi eq, %arg1, %c0_i32_53 : i32
    %159 = arith.extui %158 : i1 to i32
    %c0_i32_54 = arith.constant 0 : i32
    %160 = arith.cmpi ne, %159, %c0_i32_54 : i32
    scf.if %160 {
      %c0_55 = arith.constant 0 : index
      %c0_56 = arith.constant 0 : index
      %161 = vector.load %arg10[%c0_55, %c0_56] : memref<1x128xf32, #tpu.memory_space<vmem>>, vector<1x128xf32>
      %162 = vector.shape_cast %161 : vector<1x128xf32> to vector<1x128xf32>
      %163 = vector.broadcast %162 : vector<1x128xf32> to vector<8x128xf32>
      %c0_57 = arith.constant 0 : index
      %c0_58 = arith.constant 0 : index
      %164 = vector.load %arg9[%c0_57, %c0_58] : memref<8x128xf32, #tpu.memory_space<vmem>>, vector<8x128xf32>
      tpu.vector_store %arg9[%c0_57, %c0_58], %163 {strides = array<i32>} : memref<8x128xf32, #tpu.memory_space<vmem>>, vector<8x128xf32>,
      %c0_59 = arith.constant 0 : index
      %c0_60 = arith.constant 0 : index
      %165 = vector.load %arg11[%c0_59, %c0_60] : memref<1x4xf32, #tpu.memory_space<vmem>>, vector<1x4xf32>
      %166 = vector.shape_cast %165 : vector<1x4xf32> to vector<1x4xf32>
      %167 = vector.broadcast %166 : vector<1x4xf32> to vector<8x4xf32>
      %c0_61 = arith.constant 0 : index
      %c0_62 = arith.constant 0 : index
      %168 = vector.load %arg9[%c0_61, %c0_62] : memref<8x128xf32, #tpu.memory_space<vmem>>, vector<8x4xf32>
      tpu.vector_store %arg9[%c0_61, %c0_62], %167 {strides = array<i32>} : memref<8x128xf32, #tpu.memory_space<vmem>>, vector<8x4xf32>,
    } else {
    }
    return
  }
  func.func @transform_0(%arg0: i32, %arg1: i32) -> (i32, i32) {
    %c1_i32 = arith.constant 1 : i32
    %0 = arith.muli %arg0, %c1_i32 : i32
    %1 = arith.addi %0, %arg1 : i32
    %c0_i32 = arith.constant 0 : i32
    %c0_i32_0 = arith.constant 0 : i32
    return %1, %c0_i32 : i32, i32
  }
  func.func @transform_1(%arg0: i32, %arg1: i32) -> (i32, i32) {
    %c0_i32 = arith.constant 0 : i32
    %c0_i32_0 = arith.constant 0 : i32
    %c0_i32_1 = arith.constant 0 : i32
    return %c0_i32, %c0_i32_0 : i32, i32
  }
  func.func @transform_2(%arg0: i32, %arg1: i32) -> (i32, i32) {
    %c0_i32 = arith.constant 0 : i32
    %c0_i32_0 = arith.constant 0 : i32
    %c0_i32_1 = arith.constant 0 : i32
    return %c0_i32, %c0_i32_0 : i32, i32
  }
  func.func @transform_3(%arg0: i32, %arg1: i32) -> (i32, i32) {
    %c1_i32 = arith.constant 1 : i32
    %0 = arith.muli %arg0, %c1_i32 : i32
    %1 = arith.addi %0, %arg1 : i32
    %c0_i32 = arith.constant 0 : i32
    %c0_i32_0 = arith.constant 0 : i32
    return %1, %c0_i32 : i32, i32
  }
  func.func @transform_4(%arg0: i32, %arg1: i32) -> (i32, i32) {
    %c1_i32 = arith.constant 1 : i32
    %0 = arith.muli %arg0, %c1_i32 : i32
    %1 = arith.addi %0, %arg1 : i32
    %c0_i32 = arith.constant 0 : i32
    %c0_i32_0 = arith.constant 0 : i32
    return %1, %c0_i32 : i32, i32
  }
  func.func @transform_5(%arg0: i32, %arg1: i32) -> (i32, i32, i32) {
    %c1_i32 = arith.constant 1 : i32
    %0 = arith.muli %arg0, %c1_i32 : i32
    %1 = arith.addi %0, %arg1 : i32
    %c0_i32 = arith.constant 0 : i32
    %c0_i32_0 = arith.constant 0 : i32
    %c0_i32_1 = arith.constant 0 : i32
    return %c0_i32, %1, %c0_i32_0 : i32, i32, i32
  }
  func.func @transform_6(%arg0: i32, %arg1: i32) -> (i32, i32) {
    %c1_i32 = arith.constant 1 : i32
    %0 = arith.muli %arg0, %c1_i32 : i32
    %1 = arith.addi %0, %arg1 : i32
    %c0_i32 = arith.constant 0 : i32
    %c0_i32_0 = arith.constant 0 : i32
    return %1, %c0_i32 : i32, i32
  }
  func.func @transform_7(%arg0: i32, %arg1: i32) -> (i32, i32) {
    %c0_i32 = arith.constant 0 : i32
    %c0_i32_0 = arith.constant 0 : i32
    return %arg0, %c0_i32 : i32, i32
  }
}

</mosaic_0001>

<llo_original>
// kernel: tpu_custom_call.1
$region0: #{tpu_custom_call.1}
  #allocation0 [shape = 'u32[]', space=smem, size = 0x4, offset = 0x4, fixed_abs, tag = 'smem constant byte address 0x4 - core index']
  #allocation1 [shape = 'u32[144,128]{1,0:T(1,128)}', space=vmem, size = 0x12000, scoped, tag = 'internal scratch']
  #allocation2 [shape = 'f32[1,128]{1,0:T(1,128)}', space=vmem, size = 0x200, scoped, tag = 'scratch operand']
  #allocation3 [shape = 'f32[1,4]{1,0:T(1,128)}', space=vmem, size = 0x200, scoped, tag = 'scratch operand']
  #allocation4 [shape = 'f32[1,1]{1,0:T(1,128)S(1)}', space=vmem, size = 0x200, scoped, tag = 'scoped memory for tpu_custom_call.1']
  %s0 = inlined_call_operand.vmem [shape: f32[16,128], index: 0, kind: input, shape index: {}]
  %s1 = inlined_call_operand.vmem [shape: f32[1,128], index: 1, kind: input, shape index: {}]
  %s2 = inlined_call_operand.<no memory space> [shape: f32[1,1], index: 2, kind: input, shape index: {}]
  %s3 = inlined_call_operand.vmem [shape: f32[16,1], index: 3, kind: input, shape index: {}]
  %s4 = inlined_call_operand.vmem [shape: f32[16,4], index: 4, kind: input, shape index: {}]
  %s5 = inlined_call_operand.hbm [shape: f32[4,16,128], index: 5, kind: input, shape index: {}]
  %s6 = inlined_call_operand.vmem [shape: f32[16,1], index: 6, kind: output, shape index: {0}]
  %s7 = inlined_call_operand.hbm [shape: f32[16,128], index: 7, kind: output, shape index: {1}]
  %8 = xla_tuple %s6, %s7
  %s9 = sld [smem:[#allocation0]]
  $region77: #{tpu_custom_call.1} parent=0
    _
  %s11 = ssub.s32 1, %s9
  %s12 = scalar_select 0, %s11, %s9
  %v13 = vstv %s2
  %14 = vst [vmem:[#allocation4] sm:$0x1] %v13
  $region1: #{tpu_custom_call.1} parent=0
    #allocation5 [shape = 'u8[32768]{0}', space=vmem, size = 0x8000, scoped, tag = 'input window, operand 5']
    #allocation6 [shape = 's32[2]{0}', space=sflag, size = 0x8, scoped, tag = 'scoped memory for tpu_custom_call.1']
    #allocation7 [shape = 's32[2]{0}', space=sflag, size = 0x8, scoped, tag = 'scoped memory for tpu_custom_call.1']
    #allocation8 [shape = 'u8[8192]{0}', space=vmem, size = 0x2000, scoped, tag = 'output window, operand 1']
    %15 = vsyncpa [#allocation6], 0
    %s16 = scalar_lea.sflag [#allocation6], 1
    %17 = vsyncpa %s16, 0
    %18 = vsyncpa [#allocation7], 0
    %s19 = scalar_lea.sflag [#allocation7], 1
    %20 = vsyncpa %s19, 0
    loop: start=0, step=1, limit=4
    $region2: #{tpu_custom_call.1} parent=1 // loop_pre_header
      _
    $region3: #{tpu_custom_call.1} parent=1 // loop_header
      %s22 = sphi 0, %s26
      %p23 = scmp.ge.s32.totalorder %s22, 4
      %s29 = sphi 0, %s41
      %s30 = sphi 0, %s37
      %s31 = sphi 0, %s29
      %s32 = sphi 0, %s30
      %s33 = sphi 0, %s31
      %s34 = sphi 0, %s32
      %s46 = sphi 0, %s48
      %s49 = sphi 0, %s46
      %s50 = sphi 0, %s49
      %s66 = sphi 0, %s50
      %s70 = sphi 0, %s70
      %s72 = sphi 0, %s70
      %s73 = sphi 0, %s72
      %s87 = sphi 0, %s73
      %s91 = sphi 0, %s91
      %s93 = sphi 0, %s91
      %s94 = sphi 0, %s93
      %s108 = sphi 0, %s94
      %s116 = sphi 0, %s118
      %s119 = sphi 0, %s116
      %s120 = sphi 0, %s119
      %s136 = sphi 0, %s120
      %s144 = sphi 0, %s146
      %s147 = sphi 0, %s144
      %s148 = sphi 0, %s147
      %s164 = sphi 0, %s148
      %s172 = sphi 0, %s174
      %s175 = sphi 0, %s172
      %s176 = sphi 0, %s175
      %s192 = sphi 0, %s176
      %s200 = sphi 0, %s202
      %s203 = sphi 0, %s200
      %s204 = sphi 0, %s203
      %s220 = sphi 0, %s204
      %s226 = sphi 0, %s228
      %s229 = sphi 0, %s226
      %s230 = sphi 0, %s229
      %s246 = sphi 0, %s230
    $region4: #{tpu_custom_call.1} parent=1 // loop_header_branch
      %25 = sbr.rel (%p23) target = $region8
    $region5: #{tpu_custom_call.1} parent=1 // loop_body
      %s27 = ssub.s32 %s22, 1
      %s28 = ssub.s32 %s22, 2
      %s35 = sadd.s32 1, %s30
      %p36 = scmp.ge.s32.totalorder %s35, 1
      %s37 = scalar_select %p36, 0, %s35
      %s38 = sadd.s32 1, %s29
      %s39 = scalar_select %p36, %s38, %s29
      %p40 = scmp.ge.s32.totalorder %s39, 2
      %s41 = scalar_select %p40, 0, %s39
      %s42 = sadd.s32 %s29, %s30
      %s43 = sadd.s32 %s41, %s37
      %s44 = ssub.s32 %s42, %s43
      %p45 = scmp.eq.s32.totalorder %s44, 0
      %s47 = sadd.s32 %s46, 1
      %s48 = scalar_select %p45, %s46, %s47
      %p51 = pneg %p45
      %p52 = scmp.eq.s32.totalorder %s22, 1
      %p53 = por %p51, %p52
      %p54 = scmp.ne.s32.totalorder %s46, %s49
      %p55 = scmp.eq.s32.totalorder %s22, 0
      %p56 = por %p54, %p55
      %p57 = scmp.ne.s32.totalorder %s46, %s49
      %p58 = scmp.eq.s32.totalorder %s27, 1
      %p59 = por %p57, %p58
      %p60 = scmp.ne.s32.totalorder %s49, %s50
      %p61 = scmp.eq.s32.totalorder %s27, 0
      %p62 = por %p60, %p61
      %p63 = scmp.ne.s32.totalorder %s49, %s50
      %p64 = scmp.eq.s32.totalorder %s28, 1
      %p65 = por %p63, %p64
      %p67 = scmp.ne.s32.totalorder %s50, %s66
      %p68 = scmp.eq.s32.totalorder %s28, 0
      %p69 = por %p67, %p68
      %s71 = sadd.s32 %s70, 1
      %p74 = scmp.eq.s32.totalorder %s22, 1
      %p75 = scmp.ne.s32.totalorder %s70, %s72
      %p76 = scmp.eq.s32.totalorder %s22, 0
      %p77 = por %p75, %p76
      %p78 = scmp.ne.s32.totalorder %s70, %s72
      %p79 = scmp.eq.s32.totalorder %s27, 1
      %p80 = por %p78, %p79
      %p81 = scmp.ne.s32.totalorder %s72, %s73
      %p82 = scmp.eq.s32.totalorder %s27, 0
      %p83 = por %p81, %p82
      %p84 = scmp.ne.s32.totalorder %s72, %s73
      %p85 = scmp.eq.s32.totalorder %s28, 1
      %p86 = por %p84, %p85
      %p88 = scmp.ne.s32.totalorder %s73, %s87
      %p89 = scmp.eq.s32.totalorder %s28, 0
      %p90 = por %p88, %p89
      %s92 = sadd.s32 %s91, 1
      %p95 = scmp.eq.s32.totalorder %s22, 1
      %p96 = scmp.ne.s32.totalorder %s91, %s93
      %p97 = scmp.eq.s32.totalorder %s22, 0
      %p98 = por %p96, %p97
      %p99 = scmp.ne.s32.totalorder %s91, %s93
      %p100 = scmp.eq.s32.totalorder %s27, 1
      %p101 = por %p99, %p100
      %p102 = scmp.ne.s32.totalorder %s93, %s94
      %p103 = scmp.eq.s32.totalorder %s27, 0
      %p104 = por %p102, %p103
      %p105 = scmp.ne.s32.totalorder %s93, %s94
      %p106 = scmp.eq.s32.totalorder %s28, 1
      %p107 = por %p105, %p106
      %p109 = scmp.ne.s32.totalorder %s94, %s108
      %p110 = scmp.eq.s32.totalorder %s28, 0
      %p111 = por %p109, %p110
      %s112 = sadd.s32 %s29, %s30
      %s113 = sadd.s32 %s41, %s37
      %s114 = ssub.s32 %s112, %s113
      %p115 = scmp.eq.s32.totalorder %s114, 0
      %s117 = sadd.s32 %s116, 1
      %s118 = scalar_select %p115, %s116, %s117
      %p121 = pneg %p115
      %p122 = scmp.eq.s32.totalorder %s22, 1
      %p123 = por %p121, %p122
      %p124 = scmp.ne.s32.totalorder %s116, %s119
      %p125 = scmp.eq.s32.totalorder %s22, 0
      %p126 = por %p124, %p125
      %p127 = scmp.ne.s32.totalorder %s116, %s119
      %p128 = scmp.eq.s32.totalorder %s27, 1
      %p129 = por %p127, %p128
      %p130 = scmp.ne.s32.totalorder %s119, %s120
      %p131 = scmp.eq.s32.totalorder %s27, 0
      %p132 = por %p130, %p131
      %p133 = scmp.ne.s32.totalorder %s119, %s120
      %p134 = scmp.eq.s32.totalorder %s28, 1
      %p135 = por %p133, %p134
      %p137 = scmp.ne.s32.totalorder %s120, %s136
      %p138 = scmp.eq.s32.totalorder %s28, 0
      %p139 = por %p137, %p138
      %s140 = sadd.s32 %s29, %s30
      %s141 = sadd.s32 %s41, %s37
      %s142 = ssub.s32 %s140, %s141
      %p143 = scmp.eq.s32.totalorder %s142, 0
      %s145 = sadd.s32 %s144, 1
      %s146 = scalar_select %p143, %s144, %s145
      %p149 = pneg %p143
      %p150 = scmp.eq.s32.totalorder %s22, 1
      %p151 = por %p149, %p150
      %p152 = scmp.ne.s32.totalorder %s144, %s147
      %p153 = scmp.eq.s32.totalorder %s22, 0
      %p154 = por %p152, %p153
      %p155 = scmp.ne.s32.totalorder %s144, %s147
      %p156 = scmp.eq.s32.totalorder %s27, 1
      %p157 = por %p155, %p156
      %p158 = scmp.ne.s32.totalorder %s147, %s148
      %p159 = scmp.eq.s32.totalorder %s27, 0
      %p160 = por %p158, %p159
      %p161 = scmp.ne.s32.totalorder %s147, %s148
      %p162 = scmp.eq.s32.totalorder %s28, 1
      %p163 = por %p161, %p162
      %p165 = scmp.ne.s32.totalorder %s148, %s164
      %p166 = scmp.eq.s32.totalorder %s28, 0
      %p167 = por %p165, %p166
      %s168 = sadd.s32 %s29, %s30
      %s169 = sadd.s32 %s41, %s37
      %s170 = ssub.s32 %s168, %s169
      %p171 = scmp.eq.s32.totalorder %s170, 0
      %s173 = sadd.s32 %s172, 1
      %s174 = scalar_select %p171, %s172, %s173
      %p177 = pneg %p171
      %p178 = scmp.eq.s32.totalorder %s22, 1
      %p179 = por %p177, %p178
      %p180 = scmp.ne.s32.totalorder %s172, %s175
      %p181 = scmp.eq.s32.totalorder %s22, 0
      %p182 = por %p180, %p181
      %p183 = scmp.ne.s32.totalorder %s172, %s175
      %p184 = scmp.eq.s32.totalorder %s27, 1
      %p185 = por %p183, %p184
      %p186 = scmp.ne.s32.totalorder %s175, %s176
      %p187 = scmp.eq.s32.totalorder %s27, 0
      %p188 = por %p186, %p187
      %p189 = scmp.ne.s32.totalorder %s175, %s176
      %p190 = scmp.eq.s32.totalorder %s28, 1
      %p191 = por %p189, %p190
      %p193 = scmp.ne.s32.totalorder %s176, %s192
      %p194 = scmp.eq.s32.totalorder %s28, 0
      %p195 = por %p193, %p194
      %s196 = sadd.s32 %s29, %s30
      %s197 = sadd.s32 %s41, %s37
      %s198 = ssub.s32 %s196, %s197
      %p199 = scmp.eq.s32.totalorder %s198, 0
      %s201 = sadd.s32 %s200, 1
      %s202 = scalar_select %p199, %s200, %s201
      %p205 = pneg %p199
      %p206 = scmp.eq.s32.totalorder %s22, 1
      %p207 = por %p205, %p206
      %p208 = scmp.ne.s32.totalorder %s200, %s203
      %p209 = scmp.eq.s32.totalorder %s22, 0
      %p210 = por %p208, %p209
      %p211 = scmp.ne.s32.totalorder %s200, %s203
      %p212 = scmp.eq.s32.totalorder %s27, 1
      %p213 = por %p211, %p212
      %p214 = scmp.ne.s32.totalorder %s203, %s204
      %p215 = scmp.eq.s32.totalorder %s27, 0
      %p216 = por %p214, %p215
      %p217 = scmp.ne.s32.totalorder %s203, %s204
      %p218 = scmp.eq.s32.totalorder %s28, 1
      %p219 = por %p217, %p218
      %p221 = scmp.ne.s32.totalorder %s204, %s220
      %p222 = scmp.eq.s32.totalorder %s28, 0
      %p223 = por %p221, %p222
      %s224 = ssub.s32 %s29, %s41
      %p225 = scmp.eq.s32.totalorder %s224, 0
      %s227 = sadd.s32 %s226, 1
      %s228 = scalar_select %p225, %s226, %s227
      %p231 = pneg %p225
      %p232 = scmp.eq.s32.totalorder %s22, 1
      %p233 = por %p231, %p232
      %p234 = scmp.ne.s32.totalorder %s226, %s229
      %p235 = scmp.eq.s32.totalorder %s22, 0
      %p236 = por %p234, %p235
      %p237 = scmp.ne.s32.totalorder %s226, %s229
      %p238 = scmp.eq.s32.totalorder %s27, 1
      %p239 = por %p237, %p238
      %p240 = scmp.ne.s32.totalorder %s229, %s230
      %p241 = scmp.eq.s32.totalorder %s27, 0
      %p242 = por %p240, %p241
      %p243 = scmp.ne.s32.totalorder %s229, %s230
      %p244 = scmp.eq.s32.totalorder %s28, 1
      %p245 = por %p243, %p244
      %p247 = scmp.ne.s32.totalorder %s230, %s246
      %p248 = scmp.eq.s32.totalorder %s28, 0
      %p249 = por %p247, %p248
      %p250 = scmp.le.s32.totalorder 1, %s22
      %p251 = scmp.lt.s32.totalorder %s22, 3
      %p252 = pnand %p250, %p251
      %p253 = pneg %p252
      // Predicated region
      $region9: #{tpu_custom_call.1} parent=5 // pred_check
        _
      $region10: #{tpu_custom_call.1} parent=5 // pred_check_branch
        %255 = sbr.rel (%p252) target = $region12
      $region11: #{tpu_custom_call.1} parent=5 // pred_region
        %s256 = ssub.s32 %s22, 1
        // Predicated region
        $region13: #{tpu_custom_call.1} parent=11 // pred_check
          %p257 = pneg %p83
        $region14: #{tpu_custom_call.1} parent=11 // pred_check_branch
          %259 = sbr.rel (%p257) target = $region16
        $region15: #{tpu_custom_call.1} parent=11 // pred_region
          _
        $region16: #{tpu_custom_call.1} parent=11 // pred_fallthru
          _
        // Predicated region
        $region17: #{tpu_custom_call.1} parent=11 // pred_check
          %p260 = pneg %p104
        $region18: #{tpu_custom_call.1} parent=11 // pred_check_branch
          %262 = sbr.rel (%p260) target = $region20
        $region19: #{tpu_custom_call.1} parent=11 // pred_region
          _
        $region20: #{tpu_custom_call.1} parent=11 // pred_fallthru
          _
      $region12: #{tpu_custom_call.1} parent=5 // pred_fallthru
        _
      %p263 = scmp.lt.s32.totalorder %s22, 2
      // Predicated region
      $region21: #{tpu_custom_call.1} parent=5 // pred_check
        %p264 = pneg %p263
      $region22: #{tpu_custom_call.1} parent=5 // pred_check_branch
        %266 = sbr.rel (%p264) target = $region24
      $region23: #{tpu_custom_call.1} parent=5 // pred_region
        // Predicated region
        $region25: #{tpu_custom_call.1} parent=23 // pred_check
          %p267 = pneg %p56
        $region26: #{tpu_custom_call.1} parent=23 // pred_check_branch
          %269 = sbr.rel (%p267) target = $region28
        $region27: #{tpu_custom_call.1} parent=23 // pred_region
          %s270 = sadd.s32 %s29, %s30
          %p271 = scmp.lt.s32.totalorder %s270, 1
          %s272 = scalar_select %p271, %s270, 1
          %s273 = smul.addr %s272, 8
          %s274 = scalar_lea.vmem %s0, %s273
          %s275 = sadd.s32 %s29, %s30
        $region28: #{tpu_custom_call.1} parent=23 // pred_fallthru
          _
        // Predicated region
        $region29: #{tpu_custom_call.1} parent=23 // pred_check
          %p276 = pneg %p126
        $region30: #{tpu_custom_call.1} parent=23 // pred_check_branch
          %278 = sbr.rel (%p276) target = $region32
        $region31: #{tpu_custom_call.1} parent=23 // pred_region
          %s279 = sadd.s32 %s29, %s30
          %p280 = scmp.lt.s32.totalorder %s279, 1
          %s281 = scalar_select %p280, %s279, 1
          %s282 = smul.addr %s281, 8
          %s283 = scalar_lea.vmem %s3, %s282
          %s284 = sadd.s32 %s29, %s30
        $region32: #{tpu_custom_call.1} parent=23 // pred_fallthru
          _
        // Predicated region
        $region33: #{tpu_custom_call.1} parent=23 // pred_check
          %p285 = pneg %p154
        $region34: #{tpu_custom_call.1} parent=23 // pred_check_branch
          %287 = sbr.rel (%p285) target = $region36
        $region35: #{tpu_custom_call.1} parent=23 // pred_region
          %s288 = sadd.s32 %s29, %s30
          %p289 = scmp.lt.s32.totalorder %s288, 1
          %s290 = scalar_select %p289, %s288, 1
          %s291 = smul.addr %s290, 8
          %s292 = scalar_lea.vmem %s4, %s291
          %s293 = sadd.s32 %s29, %s30
        $region36: #{tpu_custom_call.1} parent=23 // pred_fallthru
          _
        // Predicated region
        $region37: #{tpu_custom_call.1} parent=23 // pred_check
          %p294 = pneg %p182
        $region38: #{tpu_custom_call.1} parent=23 // pred_check_branch
          %296 = sbr.rel (%p294) target = $region40
        $region39: #{tpu_custom_call.1} parent=23 // pred_region
          %s297 = sand.u32 %s172, 1
          %s298 = scalar_lea.sflag [#allocation6], %s297
          %s299 = sand.u32 %s172, 1
          %s300 = smul.addr %s299, 32
          %s301 = scalar_lea.vmem [#allocation5], %s300
          %s302 = sadd.s32 %s29, %s30
          %s304 = ssub.s32 512, 512
          %305 = vsyncadd %s298, %s304
          %s306 = smul.addr %s302, 128
          %s307 = scalar_lea.hbm %s5, %s306
          %s308 = sshll.u32 %s301, 4
          %s309 = int_to_ptr.vmem [resolvable:$true] %s308
          %314 = dma.hbm_to_vmem [thread:$0]  %s307, 512, %s309, %s298, 256, 128, 8
        $region40: #{tpu_custom_call.1} parent=23 // pred_fallthru
          _
      $region24: #{tpu_custom_call.1} parent=5 // pred_fallthru
        _
      %p315 = scmp.le.s32.totalorder 1, %s22
      %p316 = scmp.lt.s32.totalorder %s22, 3
      %p317 = pnand %p315, %p316
      %p318 = pneg %p317
      // Predicated region
      $region41: #{tpu_custom_call.1} parent=5 // pred_check
        _
      $region42: #{tpu_custom_call.1} parent=5 // pred_check_branch
        %320 = sbr.rel (%p317) target = $region44
      $region43: #{tpu_custom_call.1} parent=5 // pred_region
        %s321 = ssub.s32 %s22, 1
        %s322 = sand.u32 %s175, 1
        %s323 = scalar_lea.sflag [#allocation6], %s322
        %s324 = sand.u32 %s175, 1
        %s325 = smul.addr %s324, 32
        %s326 = scalar_lea.vmem [#allocation5], %s325
        // Predicated region
        $region45: #{tpu_custom_call.1} parent=43 // pred_check
          %p327 = pneg %p188
        $region46: #{tpu_custom_call.1} parent=43 // pred_check_branch
          %329 = sbr.rel (%p327) target = $region48
        $region47: #{tpu_custom_call.1} parent=43 // pred_region
          %330 = dma.done %s323, 512
        $region48: #{tpu_custom_call.1} parent=43 // pred_fallthru
          _
        %s331 = sadd.s32 %s31, %s32
        %p332 = scmp.lt.s32.totalorder %s331, 1
        %s333 = scalar_select %p332, %s331, 1
        %s334 = smul.addr %s333, 8
        %s335 = scalar_lea.vmem %s0, %s334
        %p336 = pneg %p62
        %p337 = pneg %p59
        %p338 = pneg %p83
        %p339 = pneg %p80
        %p340 = pneg %p104
        %p341 = pneg %p101
        %s342 = sadd.s32 %s31, %s32
        %p343 = scmp.lt.s32.totalorder %s342, 1
        %s344 = scalar_select %p343, %s342, 1
        %s345 = smul.addr %s344, 8
        %s346 = scalar_lea.vmem %s3, %s345
        %p347 = pneg %p132
        %p348 = pneg %p129
        %s349 = sadd.s32 %s31, %s32
        %p350 = scmp.lt.s32.totalorder %s349, 1
        %s351 = scalar_select %p350, %s349, 1
        %s352 = smul.addr %s351, 8
        %s353 = scalar_lea.vmem %s4, %s352
        %p354 = pneg %p160
        %p355 = pneg %p157
        %s356 = sand.u32 %s175, 1
        %s357 = scalar_lea.sflag [#allocation6], %s356
        %s358 = sand.u32 %s175, 1
        %s359 = smul.addr %s358, 32
        %s360 = scalar_lea.vmem [#allocation5], %s359
        %p361 = pneg %p188
        %p362 = pneg %p185
        %p363 = pneg %p216
        %p364 = pneg %p213
        %s365 = sadd.s32 %s31, %s32
        %p366 = scmp.lt.s32.totalorder %s365, 1
        %s367 = scalar_select %p366, %s365, 1
        %s368 = smul.addr %s367, 8
        %s369 = scalar_lea.vmem %s6, %s368
        %p370 = pneg %p242
        %p371 = pneg %p239
        %s372 = sand.u32 %s229, 1
        %s373 = scalar_lea.sflag [#allocation7], %s372
        %s374 = sand.u32 %s229, 1
        %s375 = smul.addr %s374, 8
        %s376 = scalar_lea.vmem [#allocation8], %s375
        %s377 = sadd.s32 %s31, %s32
        %p378 = scmp.lt.s32.totalorder %s377, 1
        %s379 = scalar_select %p378, %s377, 1
        %s380 = smul.addr %s379, 8
        %s381 = scalar_lea.vmem %s0, %s380
        %s382 = sadd.s32 %s31, %s32
        %s383 = sadd.s32 %s31, %s32
        %p384 = scmp.lt.s32.totalorder %s383, 1
        %s385 = scalar_select %p384, %s383, 1
        %s386 = smul.addr %s385, 8
        %s387 = scalar_lea.vmem %s3, %s386
        %s388 = sadd.s32 %s31, %s32
        %s389 = sadd.s32 %s31, %s32
        %p390 = scmp.lt.s32.totalorder %s389, 1
        %s391 = scalar_select %p390, %s389, 1
        %s392 = smul.addr %s391, 8
        %s393 = scalar_lea.vmem %s4, %s392
        %s394 = sadd.s32 %s31, %s32
        %s395 = sadd.s32 %s31, %s32
        %s396 = sadd.s32 %s31, %s32
        %p397 = scmp.lt.s32.totalorder %s396, 1
        %s398 = scalar_select %p397, %s396, 1
        %s399 = smul.addr %s398, 8
        %s400 = scalar_lea.vmem %s6, %s399
        %s401 = sadd.s32 %s31, %s32
        %p402 = scmp.eq.s32.totalorder %s32, 0
        // Predicated region
        $region49: #{tpu_custom_call.1} parent=43 // pred_check
          %p403 = pneg %p402
        $region50: #{tpu_custom_call.1} parent=43 // pred_check_branch
          %405 = sbr.rel (%p403) target = $region52
        $region51: #{tpu_custom_call.1} parent=43 // pred_region
          %406 = vst [vmem:[#allocation2] sm:$0x1] 0.0
          %vm407 = vcmask 24576
          %408 = vst.msk [vmem:[#allocation3] sm:$0x1] %vm407, 0.0
        $region52: #{tpu_custom_call.1} parent=43 // pred_fallthru
          _
        %v409 = vld [vmem:[%s381] sm:$0xff]
        %v410 = vld [vmem:[#allocation4] sm:$0x1]
        %v411 = vld [vmem:[%s387] sm:$0xff]
        %v412 = vld [vmem:[%s393] sm:$0xff]
        %v413 = vld [vmem:[%s1] sm:$0x1]
        %v415 = vlaneseq
        %v416 = vshrl.u32 %v415, 7
        %v417 = vsub.s32 0, %v416
        %v418 = vrot.slane %v413, %v417
        %v420 = vmul.f32 %v409, %v418
        %421 = vadd.xlane.f32.xlu0 %v420
        %v422 = vpop.xlane.xlu0 %421
        %v424 = vlaneseq
        %v425 = vshrl.u32 %v424, 7
        %v426 = vsub.s32 0, %v425
        %v427 = vrot.slane %v410, %v426
        %v429 = vadd.f32 %v422, %v427
        %vm430 = vcmask 7168
        %431 = vst.msk [vmem:[%s400] sm:$0xff] %vm430, %v429
        %v432 = vsub.f32 %v429, %v411
        %v433 = vsel %vm430, %v429, 0.0
        %434 = vadd.xlane.f32.xlu0 %v433
        %v435 = vpop.xlane.xlu0 %434
        %v436 = vrot.slane %v435, 4
        %v437 = vadd.f32 %v435, %v436
        %v438 = vrot.slane %v437, 2
        %v439 = vadd.f32 %v437, %v438
        %v440 = vrot.slane %v439, 1
        %v441 = vadd.f32 %v439, %v440
        %s442 = vtos %v441
        %v443 = vsel %vm430, %v411, 0.0
        %444 = vadd.xlane.f32.xlu0 %v443
        %v445 = vpop.xlane.xlu0 %444
        %v446 = vrot.slane %v445, 4
        %v447 = vadd.f32 %v445, %v446
        %v448 = vrot.slane %v447, 2
        %v449 = vadd.f32 %v447, %v448
        %v450 = vrot.slane %v449, 1
        %v451 = vadd.f32 %v449, %v450
        %s452 = vtos %v451
        %v453 = vmul.f32 %v429, %v429
        %v454 = vsel %vm430, %v453, 0.0
        %455 = vadd.xlane.f32.xlu0 %v454
        %v456 = vpop.xlane.xlu0 %455
        %v457 = vrot.slane %v456, 4
        %v458 = vadd.f32 %v456, %v457
        %v459 = vrot.slane %v458, 2
        %v460 = vadd.f32 %v458, %v459
        %v461 = vrot.slane %v460, 1
        %v462 = vadd.f32 %v460, %v461
        %s463 = vtos %v462
        %v464 = vmul.f32 %v411, %v411
        %v465 = vsel %vm430, %v464, 0.0
        %466 = vadd.xlane.f32.xlu0 %v465
        %v467 = vpop.xlane.xlu0 %466
        %v468 = vrot.slane %v467, 4
        %v469 = vadd.f32 %v467, %v468
        %v470 = vrot.slane %v469, 2
        %v471 = vadd.f32 %v469, %v470
        %v472 = vrot.slane %v471, 1
        %v473 = vadd.f32 %v471, %v472
        %s474 = vtos %v473
        %v475 = vmul.f32 %v429, %v411
        %v476 = vsel %vm430, %v475, 0.0
        %477 = vadd.xlane.f32.xlu0 %v476
        %v478 = vpop.xlane.xlu0 %477
        %v479 = vrot.slane %v478, 4
        %v480 = vadd.f32 %v478, %v479
        %v481 = vrot.slane %v480, 2
        %v482 = vadd.f32 %v480, %v481
        %v483 = vrot.slane %v482, 1
        %v484 = vadd.f32 %v482, %v483
        %s485 = vtos %v484
        %v486 = vmul.f32 %v432, %v432
        %v487 = vsel %vm430, %v486, 0.0
        %488 = vadd.xlane.f32.xlu0 %v487
        %v489 = vpop.xlane.xlu0 %488
        %v490 = vrot.slane %v489, 4
        %v491 = vadd.f32 %v489, %v490
        %v492 = vrot.slane %v491, 2
        %v493 = vadd.f32 %v491, %v492
        %v494 = vrot.slane %v493, 1
        %v495 = vadd.f32 %v493, %v494
        %s496 = vtos %v495
        %v497 = vld [vmem:[%s326] sm:$0xff]
        %v498 = vmul.f32 %v497, %v497
        %499 = vadd.xlane.f32.xlu0 %v498
        %v500 = vpop.xlane.xlu0 %499
        %v501 = vmax.f32 %v500, 1e-16
        %v502 = vrsqrt.pop %v501
        %v503 = vmul.f32 %v497, %v502
        %v504 = vadd.f32 %v503, 0.0
        %v505 = vmul.f32 %v503, %v503
        %506 = vadd.xlane.f32.xlu0 %v505
        %v507 = vpop.xlane.xlu0 %506
        %v508 = vrot.slane %v507, 4
        %v509 = vadd.f32 %v507, %v508
        %v510 = vrot.slane %v509, 2
        %v511 = vadd.f32 %v509, %v510
        %v512 = vrot.slane %v511, 1
        %v513 = vadd.f32 %v511, %v512
        %s514 = vtos %v513
        %s515 = sadd.f32 %s514, 0.0
        %s516 = scalar_lea.vmem %s326, 8 [#allocation5]
        %v517 = vld [vmem:[%s516] sm:$0xff]
        %v518 = vmul.f32 %v517, %v517
        %519 = vadd.xlane.f32.xlu0 %v518
        %v520 = vpop.xlane.xlu0 %519
        %v521 = vmax.f32 %v520, 1e-16
        %v522 = vrsqrt.pop %v521
        %v523 = vmul.f32 %v517, %v522
        %v524 = vadd.f32 %v504, %v523
        %v525 = vmul.f32 %v523, %v523
        %526 = vadd.xlane.f32.xlu0 %v525
        %v527 = vpop.xlane.xlu0 %526
        %v528 = vrot.slane %v527, 4
        %v529 = vadd.f32 %v527, %v528
        %v530 = vrot.slane %v529, 2
        %v531 = vadd.f32 %v529, %v530
        %v532 = vrot.slane %v531, 1
        %v533 = vadd.f32 %v531, %v532
        %s534 = vtos %v533
        %s535 = sadd.f32 %s515, %s534
        %s536 = scalar_lea.vmem %s326, 16 [#allocation5]
        %v537 = vld [vmem:[%s536] sm:$0xff]
        %v538 = vmul.f32 %v537, %v537
        %539 = vadd.xlane.f32.xlu0 %v538
        %v540 = vpop.xlane.xlu0 %539
        %v541 = vmax.f32 %v540, 1e-16
        %v542 = vrsqrt.pop %v541
        %v543 = vmul.f32 %v537, %v542
        %v544 = vadd.f32 %v524, %v543
        %v545 = vmul.f32 %v543, %v543
        %546 = vadd.xlane.f32.xlu0 %v545
        %v547 = vpop.xlane.xlu0 %546
        %v548 = vrot.slane %v547, 4
        %v549 = vadd.f32 %v547, %v548
        %v550 = vrot.slane %v549, 2
        %v551 = vadd.f32 %v549, %v550
        %v552 = vrot.slane %v551, 1
        %v553 = vadd.f32 %v551, %v552
        %s554 = vtos %v553
        %s555 = sadd.f32 %s535, %s554
        %s556 = scalar_lea.vmem %s326, 24 [#allocation5]
        %v557 = vld [vmem:[%s556] sm:$0xff]
        %v558 = vmul.f32 %v557, %v557
        %559 = vadd.xlane.f32.xlu0 %v558
        %v560 = vpop.xlane.xlu0 %559
        %v561 = vmax.f32 %v560, 1e-16
        %v562 = vrsqrt.pop %v561
        %v563 = vmul.f32 %v557, %v562
        %v564 = vadd.f32 %v544, %v563
        %v565 = vmul.f32 %v563, %v563
        %566 = vadd.xlane.f32.xlu0 %v565
        %v567 = vpop.xlane.xlu0 %566
        %v568 = vrot.slane %v567, 4
        %v569 = vadd.f32 %v567, %v568
        %v570 = vrot.slane %v569, 2
        %v571 = vadd.f32 %v569, %v570
        %v572 = vrot.slane %v571, 1
        %v573 = vadd.f32 %v571, %v572
        %s574 = vtos %v573
        %s575 = sadd.f32 %s555, %s574
        %v576 = vmul.f32 %v564, %v564
        %577 = vadd.xlane.f32.xlu0 %v576
        %v578 = vpop.xlane.xlu0 %577
        %v579 = vrot.slane %v578, 4
        %v580 = vadd.f32 %v578, %v579
        %v581 = vrot.slane %v580, 2
        %v582 = vadd.f32 %v580, %v581
        %v583 = vrot.slane %v582, 1
        %v584 = vadd.f32 %v582, %v583
        %s585 = vtos %v584
        %s586 = ssub.f32 %s585, %s575
        %s587 = smul.f32 %s586, 0.5
        %v588 = vlaneseq
        %v589 = vand.u32 %v588, 127
        %vm590 = vcmp.eq.s32.totalorder %v589, 112
        %v591 = vstv %s442
        %v592 = vsel %vm590, %v591, 0.0
        %vm593 = vcmp.eq.s32.totalorder %v589, 113
        %v594 = vstv %s452
        %v595 = vsel %vm593, %v594, %v592
        %vm596 = vcmp.eq.s32.totalorder %v589, 114
        %v597 = vstv %s463
        %v598 = vsel %vm596, %v597, %v595
        %vm599 = vcmp.eq.s32.totalorder %v589, 115
        %v600 = vstv %s474
        %v601 = vsel %vm599, %v600, %v598
        %vm602 = vcmp.eq.s32.totalorder %v589, 116
        %v603 = vstv %s485
        %v604 = vsel %vm602, %v603, %v601
        %vm605 = vcmp.eq.s32.totalorder %v589, 117
        %v606 = vstv %s496
        %v607 = vsel %vm605, %v606, %v604
        %vm608 = vcmp.eq.s32.totalorder %v589, 118
        %v609 = vstv %s587
        %v610 = vsel %vm608, %v609, %v607
        %v611 = vld [vmem:[#allocation2] sm:$0x1]
        %v612 = vadd.f32 %v611, %v610
        %613 = vst [vmem:[#allocation2] sm:$0x1] %v612
        %v614 = vld [vmem:[#allocation3] sm:$0x1]
        %vm615 = vcmask 31744
        %v616 = vsel %vm615, %v412, 0.0
        %v617 = vrot.slane %v616, 4
        %v618 = vadd.f32 %v616, %v617
        %v619 = vrot.slane %v618, 2
        %v620 = vadd.f32 %v618, %v619
        %v621 = vrot.slane %v620, 1
        %v622 = vadd.f32 %v620, %v621
        %v623 = vadd.f32 %v614, %v622
        %vm624 = vcmask 24576
        %625 = vst.msk [vmem:[#allocation3] sm:$0x1] %vm624, %v623
        // Predicated region
        $region53: #{tpu_custom_call.1} parent=43 // pred_check
          %p626 = pneg %p402
        $region54: #{tpu_custom_call.1} parent=43 // pred_check_branch
          %628 = sbr.rel (%p626) target = $region56
        $region55: #{tpu_custom_call.1} parent=43 // pred_region
          %v629 = vld [vmem:[#allocation2] sm:$0x1]
          %v631 = vlaneseq
          %v632 = vshrl.u32 %v631, 7
          %v633 = vsub.s32 0, %v632
          %v634 = vrot.slane %v629, %v633
          %636 = vst [vmem:[%s376] sm:$0xff] %v634
          %v637 = vld [vmem:[#allocation3] sm:$0x1]
          %v639 = vlaneseq
          %v640 = vshrl.u32 %v639, 7
          %v641 = vsub.s32 0, %v640
          %v642 = vrot.slane %v637, %v641
          %644 = vst.msk [vmem:[%s376] sm:$0xff] %vm615, %v642
        $region56: #{tpu_custom_call.1} parent=43 // pred_fallthru
          _
        %s645 = sadd.s32 %s31, %s32
        %p646 = scmp.lt.s32.totalorder %s645, 1
        %s647 = scalar_select %p646, %s645, 1
        %s648 = smul.addr %s647, 8
        %s649 = scalar_lea.vmem %s6, %s648
        %s650 = sand.u32 %s229, 1
        %s651 = scalar_lea.sflag [#allocation7], %s650
        %s652 = sand.u32 %s229, 1
        %s653 = smul.addr %s652, 8
        %s654 = scalar_lea.vmem [#allocation8], %s653
        // Predicated region
        $region57: #{tpu_custom_call.1} parent=43 // pred_check
          %p655 = pneg %p213
        $region58: #{tpu_custom_call.1} parent=43 // pred_check_branch
          %657 = sbr.rel (%p655) target = $region60
        $region59: #{tpu_custom_call.1} parent=43 // pred_region
          %s658 = sadd.s32 %s31, %s32
        $region60: #{tpu_custom_call.1} parent=43 // pred_fallthru
          _
        // Predicated region
        $region61: #{tpu_custom_call.1} parent=43 // pred_check
          %p659 = pneg %p239
        $region62: #{tpu_custom_call.1} parent=43 // pred_check_branch
          %661 = sbr.rel (%p659) target = $region64
        $region63: #{tpu_custom_call.1} parent=43 // pred_region
          %s663 = ssub.s32 128, 128
          %664 = vsyncadd %s651, %s663
          %s665 = smul.addr %s31, 128
          %s666 = scalar_lea.hbm %s7, %s665
          %s668 = sshll.u32 %s654, 4
          %s669 = int_to_ptr.vmem [resolvable:$true] %s668
          %671 = dma.vmem_to_hbm [thread:$0]  %s669, 128, %s666, %s651
        $region64: #{tpu_custom_call.1} parent=43 // pred_fallthru
          _
      $region44: #{tpu_custom_call.1} parent=5 // pred_fallthru
        _
      %p672 = scmp.le.s32.totalorder 2, %s22
      // Predicated region
      $region65: #{tpu_custom_call.1} parent=5 // pred_check
        %p673 = pneg %p672
      $region66: #{tpu_custom_call.1} parent=5 // pred_check_branch
        %675 = sbr.rel (%p673) target = $region68
      $region67: #{tpu_custom_call.1} parent=5 // pred_region
        %s676 = ssub.s32 %s22, 2
        // Predicated region
        $region69: #{tpu_custom_call.1} parent=67 // pred_check
          %p677 = pneg %p219
        $region70: #{tpu_custom_call.1} parent=67 // pred_check_branch
          %679 = sbr.rel (%p677) target = $region72
        $region71: #{tpu_custom_call.1} parent=67 // pred_region
          %s680 = sadd.s32 %s33, %s34
          %p681 = scmp.lt.s32.totalorder %s680, 1
          %s682 = scalar_select %p681, %s680, 1
          %s683 = smul.addr %s682, 8
          %s684 = scalar_lea.vmem %s6, %s683
        $region72: #{tpu_custom_call.1} parent=67 // pred_fallthru
          _
        // Predicated region
        $region73: #{tpu_custom_call.1} parent=67 // pred_check
          %p685 = pneg %p245
        $region74: #{tpu_custom_call.1} parent=67 // pred_check_branch
          %687 = sbr.rel (%p685) target = $region76
        $region75: #{tpu_custom_call.1} parent=67 // pred_region
          %s688 = sand.u32 %s230, 1
          %s689 = scalar_lea.sflag [#allocation7], %s688
          %s690 = sand.u32 %s230, 1
          %s691 = smul.addr %s690, 8
          %s692 = scalar_lea.vmem [#allocation8], %s691
          %693 = dma.done %s689, 128
        $region76: #{tpu_custom_call.1} parent=67 // pred_fallthru
          _
      $region68: #{tpu_custom_call.1} parent=5 // pred_fallthru
        _
    $region6: #{tpu_custom_call.1} parent=1 // loop_footer
      %s26 = sadd.s32 1, %s22
    $region7: #{tpu_custom_call.1} parent=1 // loop_footer_branch
      %21 = sbr.rel target = $region3
    $region8: #{tpu_custom_call.1} parent=1 // loop_exit
      _
    %694 = vsyncpa [#allocation6], 1
    %s695 = scalar_lea.sflag [#allocation6], 1
    %696 = vsyncpa %s695, 1
    %697 = vsyncpa [#allocation7], 1
    %s698 = scalar_lea.sflag [#allocation7], 1
    %699 = vsyncpa %s698, 1

</llo_original>
